<compile_context>
chip_gen: v7x
topology: tpu7x:2x2x1
jax: 0.10.0
libtpu: 0.0.40
codegen_flags: <defaults>
</compile_context>

<pallas_src>
import functools

import jax
import jax.numpy as jnp
from jax.experimental import pallas as pl
from jax.experimental.pallas import tpu as pltpu

BN_EPS = 1e-5


def _round_up(v, m):
    return ((v + m - 1) // m) * m


def _graph_mlp_kernel(x_ref, w1_ref, b1_ref, w2_ref, b2_ref, out_ref,
                      *, tile_h, num_chunks):
    """out = relu(x @ W1 + b1) @ W2 + b2, hidden dim chunked in 128-multiples."""
    x = x_ref[...]                                    # (tile_n, d_in)  bf16/f32
    acc = jnp.zeros(out_ref.shape, jnp.float32)       # (tile_n, d_out_p) f32 accumulator

    # Static, fully-unrolled loop over hidden chunks (num_chunks is small, e.g. 3).
    # Each chunk's (tile_n, tile_h) intermediate is consumed immediately by the second
    # matmul, so the full (tile_n, hidden) f32 `h` never exists.
    for c in range(num_chunks):
        lo = c * tile_h
        h = jnp.dot(x, w1_ref[:, lo:lo + tile_h],
                    preferred_element_type=jnp.float32)           # MXU, f32 acc
        h = jnp.maximum(h + b1_ref[:, lo:lo + tile_h], 0.0)        # bias + ReLU (VPU)
        acc = acc + jnp.dot(h.astype(w2_ref.dtype),
                            w2_ref[lo:lo + tile_h, :],
                            preferred_element_type=jnp.float32)    # MXU, f32 acc

    out_ref[...] = (acc + b2_ref[...]).astype(out_ref.dtype)


@functools.partial(jax.jit,
                   static_argnames=("tile_n", "tile_h", "use_bf16", "out_dtype"))
def graph_mlp_forward(x, w1, b1, gamma, beta, run_mean, run_var, w2, b2,
                      *, tile_n=1024, tile_h=384, use_bf16=True, out_dtype=None):
    n, d_in = x.shape
    hidden = w1.shape[1]
    d_out = w2.shape[1]
    out_dtype = x.dtype if out_dtype is None else out_dtype

    # ---- Fold inference-mode BatchNorm into Linear1 (one-time constant fold). ----
    scale = gamma * jax.lax.rsqrt(run_var + BN_EPS)           # (1, H)
    w1f = w1 * scale                                          # (d_in, H)
    b1f = ((b1 - run_mean) * scale + beta).astype(jnp.float32)

    # ---- Hidden chunking: chunk size is a 128-multiple; hidden padded to a multiple of it.
    tile_h_eff = min(_round_up(tile_h, 128), _round_up(hidden, 128))
    hidden_p = _round_up(hidden, tile_h_eff)                  # 1056 -> 1152 for tile_h=384
    num_chunks = hidden_p // tile_h_eff

    # ---- Output lane dim padded to 128 (lane-dense stores).  x's K dim left unpadded
    #      (block dim == full array dim is exempt from the 128 rule). ----
    d_out_p = _round_up(d_out, 128)

    # ---- Balanced row tiling, multiples of 16 (bf16 packs 2 rows per sublane). ----
    row_align = 16
    tile_cap = max(row_align, _round_up(min(tile_n, n), row_align))
    num_row_tiles = -(-n // tile_cap)
    if n >= 256:
        # Give v7x's two TensorCores at least one grid step each; the extra ~0.35 us
        # per-step cost on single-core chips is negligible.
        num_row_tiles = max(num_row_tiles, 2)
    tile_n_eff = _round_up(-(-n // num_row_tiles), row_align)
    n_p = tile_n_eff * num_row_tiles

    # ---- Zero padding (all padding contributes 0 to the real outputs). ----
    x_p = jnp.pad(x, ((0, n_p - n), (0, 0)))
    w1_p = jnp.pad(w1f, ((0, 0), (0, hidden_p - hidden)))
    b1_p = jnp.pad(b1f, ((0, 0), (0, hidden_p - hidden)))      # zero bias -> relu(0)=0
    w2_p = jnp.pad(w2, ((0, hidden_p - hidden), (0, d_out_p - d_out)))
    b2_p = jnp.pad(b2.astype(jnp.float32), ((0, 0), (0, d_out_p - d_out)))

    if use_bf16:
        # MXU-native operand dtype on v5e/v6e/v7x; accumulation stays f32 in-kernel.
        x_p = x_p.astype(jnp.bfloat16)
        w1_p = w1_p.astype(jnp.bfloat16)
        w2_p = w2_p.astype(jnp.bfloat16)

    kernel = functools.partial(_graph_mlp_kernel,
                               tile_h=tile_h_eff, num_chunks=num_chunks)

    resident = lambda shape: pl.BlockSpec(shape, lambda i: (0, 0))  # grid-invariant block

    out_p = pl.pallas_call(
        kernel,
        out_shape=jax.ShapeDtypeStruct((n_p, d_out_p), out_dtype),
        grid=(num_row_tiles,),
        in_specs=[
            pl.BlockSpec((tile_n_eff, d_in), lambda i: (i, 0)),   # x tile (streamed)
            resident((d_in, hidden_p)),                           # W1 (BN-folded, resident)
            resident((1, hidden_p)),                              # b1 (BN-folded)
            resident((hidden_p, d_out_p)),                        # W2
            resident((1, d_out_p)),                               # b2
        ],
        out_specs=pl.BlockSpec((tile_n_eff, d_out_p), lambda i: (i, 0)),
        compiler_params=pltpu.CompilerParams(
            dimension_semantics=("parallel",)),                   # shard rows across TCs
    )(x_p, w1_p, b1_p, w2_p, b2_p)

    return out_p[:n, :d_out]


def reference_forward(x, w1, b1, gamma, beta, run_mean, run_var, w2, b2):
    h = x @ w1 + b1
    h = (h - run_mean) / jnp.sqrt(run_var + BN_EPS) * gamma + beta
    h = jnp.maximum(h, 0.0)
    return h @ w2 + b2


if __name__ == "__main__":
    # Small, module-consistent shapes: N nodes, input_dim features,
    # hidden_size=1056 (GraphMLP default), final_dim outputs.
    N, INPUT_DIM, HIDDEN, FINAL_DIM = 16, 64, 1056, 32

    key = jax.random.PRNGKey(0)
    kx, k1, k2, k3, k4, k5, k6, k7, k8 = jax.random.split(key, 9)

    x = jax.random.normal(kx, (N, INPUT_DIM), dtype=jnp.float32)

    # Deterministic synthetic parameters (shapes from MLP([input_dim, hidden, final_dim])).
    w1 = jax.random.normal(k1, (INPUT_DIM, HIDDEN), dtype=jnp.float32) * 0.05
    b1 = jax.random.normal(k2, (1, HIDDEN), dtype=jnp.float32) * 0.05
    gamma = 1.0 + 0.1 * jax.random.normal(k3, (1, HIDDEN), dtype=jnp.float32)
    beta = 0.1 * jax.random.normal(k4, (1, HIDDEN), dtype=jnp.float32)
    run_mean = 0.1 * jax.random.normal(k5, (1, HIDDEN), dtype=jnp.float32)
    run_var = 0.5 + jnp.abs(jax.random.normal(k6, (1, HIDDEN), dtype=jnp.float32))
    w2 = jax.random.normal(k7, (HIDDEN, FINAL_DIM), dtype=jnp.float32) * 0.05
    b2 = jax.random.normal(k8, (1, FINAL_DIM), dtype=jnp.float32) * 0.05

    out = graph_mlp_forward(x, w1, b1, gamma, beta, run_mean, run_var, w2, b2,
                            tile_n=1024, tile_h=384, use_bf16=True)
    out = jax.block_until_ready(out)

    ref = reference_forward(x, w1, b1, gamma, beta, run_mean, run_var, w2, b2)
    assert out.shape == (N, FINAL_DIM)
    # bf16 matmul operands with f32 accumulation -> relaxed tolerance vs f32 reference.
    assert jnp.allclose(out, ref, atol=3e-2, rtol=3e-2), "bf16 path mismatch vs reference"

    # Full-f32 path must match tightly.
    out_f32 = jax.block_until_ready(
        graph_mlp_forward(x, w1, b1, gamma, beta, run_mean, run_var, w2, b2,
                          tile_n=1024, tile_h=384, use_bf16=False))
    assert jnp.allclose(out_f32, ref, atol=1e-4, rtol=1e-4), "f32 path mismatch vs reference"

    print("KERNEL_OK")
</pallas_src>

<mosaic_0001>
module attributes {stable_mosaic.version = 11 : i64} {
  func.func @_graph_mlp_kernel(%arg0: i32, %arg1: memref<16x64xbf16, #tpu.memory_space<vmem>>, %arg2: memref<64x1152xbf16, #tpu.memory_space<vmem>>, %arg3: memref<1x1152xf32, #tpu.memory_space<vmem>>, %arg4: memref<1152x128xbf16, #tpu.memory_space<vmem>>, %arg5: memref<1x128xf32, #tpu.memory_space<vmem>>, %arg6: memref<16x128xf32, #tpu.memory_space<vmem>>) attributes {dimension_semantics = [#tpu.dimension_semantics<parallel>], iteration_bounds = array<i64: 1>, scalar_prefetch = 0 : i64, scratch_operands = 0 : i64, tpu.core_type = #tpu.core_type<tc>, window_params = [{transform_indices = @transform_0, window_bounds = array<i64: 16, 64>}, {pipeline_mode = #tpu.pipeline_mode<synchronous>, transform_indices = @transform_1, window_bounds = array<i64: 64, 1152>}, {pipeline_mode = #tpu.pipeline_mode<synchronous>, transform_indices = @transform_2, window_bounds = array<i64: 1, 1152>}, {pipeline_mode = #tpu.pipeline_mode<synchronous>, transform_indices = @transform_3, window_bounds = array<i64: 1152, 128>}, {pipeline_mode = #tpu.pipeline_mode<synchronous>, transform_indices = @transform_4, window_bounds = array<i64: 1, 128>}, {transform_indices = @transform_5, window_bounds = array<i64: 16, 128>}]} {
    %c0 = arith.constant 0 : index
    %c0_0 = arith.constant 0 : index
    %0 = vector.load %arg1[%c0, %c0_0] : memref<16x64xbf16, #tpu.memory_space<vmem>>, vector<16x64xbf16>
    %cst = arith.constant 0.000000e+00 : f32
    %1 = vector.broadcast %cst : f32 to vector<16x128xf32>
    %c0_1 = arith.constant 0 : index
    %c0_2 = arith.constant 0 : index
    %2 = vector.load %arg2[%c0_1, %c0_2] : memref<64x1152xbf16, #tpu.memory_space<vmem>>, vector<64x384xbf16>
    %cst_3 = arith.constant dense<0.000000e+00> : vector<16x384xf32>
    %3 = tpu.matmul %0, %2, %cst_3 {dimension_numbers = #tpu.dot_dimension_numbers<[1], [0], [0], [1], [0, 0, 1, 1], [], []>} : vector<16x64xbf16>, vector<64x384xbf16>, vector<16x384xf32> -> vector<16x384xf32>
    %c0_4 = arith.constant 0 : index
    %c0_5 = arith.constant 0 : index
    %4 = vector.load %arg3[%c0_4, %c0_5] : memref<1x1152xf32, #tpu.memory_space<vmem>>, vector<1x384xf32>
    %5 = vector.broadcast %4 : vector<1x384xf32> to vector<16x384xf32>
    %6 = arith.addf %3, %5 : vector<16x384xf32>
    %cst_6 = arith.constant 0.000000e+00 : f32
    %7 = vector.broadcast %cst_6 : f32 to vector<16x384xf32>
    %8 = arith.maximumf %6, %7 : vector<16x384xf32>
    %9 = arith.truncf %8 : vector<16x384xf32> to vector<16x384xbf16>
    %c0_7 = arith.constant 0 : index
    %c0_8 = arith.constant 0 : index
    %10 = vector.load %arg4[%c0_7, %c0_8] : memref<1152x128xbf16, #tpu.memory_space<vmem>>, vector<384x128xbf16>
    %cst_9 = arith.constant dense<0.000000e+00> : vector<16x128xf32>
    %11 = tpu.matmul %9, %10, %cst_9 {dimension_numbers = #tpu.dot_dimension_numbers<[1], [0], [0], [1], [0, 0, 1, 1], [], []>} : vector<16x384xbf16>, vector<384x128xbf16>, vector<16x128xf32> -> vector<16x128xf32>
    %12 = arith.addf %1, %11 : vector<16x128xf32>
    %c0_10 = arith.constant 0 : index
    %c384 = arith.constant 384 : index
    %13 = vector.load %arg2[%c0_10, %c384] : memref<64x1152xbf16, #tpu.memory_space<vmem>>, vector<64x384xbf16>
    %cst_11 = arith.constant dense<0.000000e+00> : vector<16x384xf32>
    %14 = tpu.matmul %0, %13, %cst_11 {dimension_numbers = #tpu.dot_dimension_numbers<[1], [0], [0], [1], [0, 0, 1, 1], [], []>} : vector<16x64xbf16>, vector<64x384xbf16>, vector<16x384xf32> -> vector<16x384xf32>
    %c0_12 = arith.constant 0 : index
    %c384_13 = arith.constant 384 : index
    %15 = vector.load %arg3[%c0_12, %c384_13] : memref<1x1152xf32, #tpu.memory_space<vmem>>, vector<1x384xf32>
    %16 = vector.broadcast %15 : vector<1x384xf32> to vector<16x384xf32>
    %17 = arith.addf %14, %16 : vector<16x384xf32>
    %cst_14 = arith.constant 0.000000e+00 : f32
    %18 = vector.broadcast %cst_14 : f32 to vector<16x384xf32>
    %19 = arith.maximumf %17, %18 : vector<16x384xf32>
    %20 = arith.truncf %19 : vector<16x384xf32> to vector<16x384xbf16>
    %c384_15 = arith.constant 384 : index
    %c0_16 = arith.constant 0 : index
    %21 = vector.load %arg4[%c384_15, %c0_16] : memref<1152x128xbf16, #tpu.memory_space<vmem>>, vector<384x128xbf16>
    %cst_17 = arith.constant dense<0.000000e+00> : vector<16x128xf32>
    %22 = tpu.matmul %20, %21, %cst_17 {dimension_numbers = #tpu.dot_dimension_numbers<[1], [0], [0], [1], [0, 0, 1, 1], [], []>} : vector<16x384xbf16>, vector<384x128xbf16>, vector<16x128xf32> -> vector<16x128xf32>
    %23 = arith.addf %12, %22 : vector<16x128xf32>
    %c0_18 = arith.constant 0 : index
    %c768 = arith.constant 768 : index
    %24 = vector.load %arg2[%c0_18, %c768] : memref<64x1152xbf16, #tpu.memory_space<vmem>>, vector<64x384xbf16>
    %cst_19 = arith.constant dense<0.000000e+00> : vector<16x384xf32>
    %25 = tpu.matmul %0, %24, %cst_19 {dimension_numbers = #tpu.dot_dimension_numbers<[1], [0], [0], [1], [0, 0, 1, 1], [], []>} : vector<16x64xbf16>, vector<64x384xbf16>, vector<16x384xf32> -> vector<16x384xf32>
    %c0_20 = arith.constant 0 : index
    %c768_21 = arith.constant 768 : index
    %26 = vector.load %arg3[%c0_20, %c768_21] : memref<1x1152xf32, #tpu.memory_space<vmem>>, vector<1x384xf32>
    %27 = vector.broadcast %26 : vector<1x384xf32> to vector<16x384xf32>
    %28 = arith.addf %25, %27 : vector<16x384xf32>
    %cst_22 = arith.constant 0.000000e+00 : f32
    %29 = vector.broadcast %cst_22 : f32 to vector<16x384xf32>
    %30 = arith.maximumf %28, %29 : vector<16x384xf32>
    %31 = arith.truncf %30 : vector<16x384xf32> to vector<16x384xbf16>
    %c768_23 = arith.constant 768 : index
    %c0_24 = arith.constant 0 : index
    %32 = vector.load %arg4[%c768_23, %c0_24] : memref<1152x128xbf16, #tpu.memory_space<vmem>>, vector<384x128xbf16>
    %cst_25 = arith.constant dense<0.000000e+00> : vector<16x128xf32>
    %33 = tpu.matmul %31, %32, %cst_25 {dimension_numbers = #tpu.dot_dimension_numbers<[1], [0], [0], [1], [0, 0, 1, 1], [], []>} : vector<16x384xbf16>, vector<384x128xbf16>, vector<16x128xf32> -> vector<16x128xf32>
    %34 = arith.addf %23, %33 : vector<16x128xf32>
    %c0_26 = arith.constant 0 : index
    %c0_27 = arith.constant 0 : index
    %35 = vector.load %arg5[%c0_26, %c0_27] : memref<1x128xf32, #tpu.memory_space<vmem>>, vector<1x128xf32>
    %36 = vector.broadcast %35 : vector<1x128xf32> to vector<16x128xf32>
    %37 = arith.addf %34, %36 : vector<16x128xf32>
    %c0_28 = arith.constant 0 : index
    %c0_29 = arith.constant 0 : index
    %38 = vector.load %arg6[%c0_28, %c0_29] : memref<16x128xf32, #tpu.memory_space<vmem>>, vector<16x128xf32>
    tpu.vector_store %arg6[%c0_28, %c0_29], %37 {strides = array<i32>} : memref<16x128xf32, #tpu.memory_space<vmem>>, vector<16x128xf32>,
    return
  }
  func.func @transform_0(%arg0: i32) -> (i32, i32) {
    %c0_i32 = arith.constant 0 : i32
    %c0_i32_0 = arith.constant 0 : i32
    return %arg0, %c0_i32 : i32, i32
  }
  func.func @transform_1(%arg0: i32) -> (i32, i32) {
    %c0_i32 = arith.constant 0 : i32
    %c0_i32_0 = arith.constant 0 : i32
    %c0_i32_1 = arith.constant 0 : i32
    return %c0_i32, %c0_i32_0 : i32, i32
  }
  func.func @transform_2(%arg0: i32) -> (i32, i32) {
    %c0_i32 = arith.constant 0 : i32
    %c0_i32_0 = arith.constant 0 : i32
    %c0_i32_1 = arith.constant 0 : i32
    return %c0_i32, %c0_i32_0 : i32, i32
  }
  func.func @transform_3(%arg0: i32) -> (i32, i32) {
    %c0_i32 = arith.constant 0 : i32
    %c0_i32_0 = arith.constant 0 : i32
    %c0_i32_1 = arith.constant 0 : i32
    return %c0_i32, %c0_i32_0 : i32, i32
  }
  func.func @transform_4(%arg0: i32) -> (i32, i32) {
    %c0_i32 = arith.constant 0 : i32
    %c0_i32_0 = arith.constant 0 : i32
    %c0_i32_1 = arith.constant 0 : i32
    return %c0_i32, %c0_i32_0 : i32, i32
  }
  func.func @transform_5(%arg0: i32) -> (i32, i32) {
    %c0_i32 = arith.constant 0 : i32
    %c0_i32_0 = arith.constant 0 : i32
    return %arg0, %c0_i32 : i32, i32
  }
}

</mosaic_0001>

<llo_original>
// kernel: graph_mlp_forward.1
$region0: #{graph_mlp_forward.1}
  #allocation0 [shape = 'u32[]', space=smem, size = 0x4, offset = 0x4, fixed_abs, tag = 'smem constant byte address 0x4 - core index']
  #allocation1 [shape = 'u32[144,128]{1,0:T(1,128)}', space=vmem, size = 0x12000, scoped, tag = 'internal scratch']
  %s0 = inlined_call_operand.vmem [shape: bf16[16,64], index: 0, kind: input, shape index: {}]
  %s1 = inlined_call_operand.vmem [shape: bf16[64,1152], index: 1, kind: input, shape index: {}]
  %s2 = inlined_call_operand.vmem [shape: f32[1,1152], index: 2, kind: input, shape index: {}]
  %s3 = inlined_call_operand.vmem [shape: bf16[1152,128], index: 3, kind: input, shape index: {}]
  %s4 = inlined_call_operand.vmem [shape: f32[1,128], index: 4, kind: input, shape index: {}]
  %s5 = inlined_call_operand.hbm [shape: f32[16,128], index: 5, kind: output, shape index: {}]
  %s6 = sld [smem:[#allocation0]]
  $region30: #{graph_mlp_forward.1} parent=0
    _
  %s8 = ssub.s32 1, %s6
  %s9 = scalar_select 0, %s8, %s6
  $region1: #{graph_mlp_forward.1} parent=0
    #allocation2 [shape = 'u8[8192]{0}', space=vmem, size = 0x2000, scoped, tag = 'output window, operand 0, single buffered']
    #allocation3 [shape = 's32[1]{0}', space=sflag, size = 0x4, scoped, tag = 'scoped memory for graph_mlp_forward.1']
    %10 = vsyncpa [#allocation3], 0
    // Predicated region
    $region2: #{graph_mlp_forward.1} parent=1 // pred_check
      _
    $region3: #{graph_mlp_forward.1} parent=1 // pred_check_branch
      %12 = sbr.rel (0) target = $region5
    $region4: #{graph_mlp_forward.1} parent=1 // pred_region
      _
    $region5: #{graph_mlp_forward.1} parent=1 // pred_fallthru
      _
    // Predicated region
    $region6: #{graph_mlp_forward.1} parent=1 // pred_check
      _
    $region7: #{graph_mlp_forward.1} parent=1 // pred_check_branch
      %14 = sbr.rel (0) target = $region9
    $region8: #{graph_mlp_forward.1} parent=1 // pred_region
      _
    $region9: #{graph_mlp_forward.1} parent=1 // pred_fallthru
      _
    // Predicated region
    $region10: #{graph_mlp_forward.1} parent=1 // pred_check
      _
    $region11: #{graph_mlp_forward.1} parent=1 // pred_check_branch
      %16 = sbr.rel (0) target = $region13
    $region12: #{graph_mlp_forward.1} parent=1 // pred_region
      _
    $region13: #{graph_mlp_forward.1} parent=1 // pred_fallthru
      _
    // Predicated region
    $region14: #{graph_mlp_forward.1} parent=1 // pred_check
      _
    $region15: #{graph_mlp_forward.1} parent=1 // pred_check_branch
      %18 = sbr.rel (0) target = $region17
    $region16: #{graph_mlp_forward.1} parent=1 // pred_region
      _
    $region17: #{graph_mlp_forward.1} parent=1 // pred_fallthru
      _
    // Predicated region
    $region18: #{graph_mlp_forward.1} parent=1 // pred_check
      _
    $region19: #{graph_mlp_forward.1} parent=1 // pred_check_branch
      %20 = sbr.rel (0) target = $region21
    $region20: #{graph_mlp_forward.1} parent=1 // pred_region
      _
    $region21: #{graph_mlp_forward.1} parent=1 // pred_fallthru
      _
    %v22 = vld [vmem:[%s0] sm:$0xf]
    %v23 = vld [vmem:[%s0 + $0x4] sm:$0xf]
    %v24 = vld [vmem:[%s1] sm:$0xff]
    %v25 = vld [vmem:[%s1 + $0x8] sm:$0xf]
    %v26 = vld [vmem:[%s1 + $0x24] sm:$0xff]
    %v27 = vld [vmem:[%s1 + $0x2c] sm:$0xf]
    %v28 = vld [vmem:[%s1 + $0x48] sm:$0xff]
    %v29 = vld [vmem:[%s1 + $0x50] sm:$0xf]
    %v30 = vld [vmem:[%s1 + $0x6c] sm:$0xff]
    %v31 = vld [vmem:[%s1 + $0x74] sm:$0xf]
    %v32 = vld [vmem:[%s1 + $0x90] sm:$0xff]
    %v33 = vld [vmem:[%s1 + $0x98] sm:$0xf]
    %v34 = vld [vmem:[%s1 + $0xb4] sm:$0xff]
    %v35 = vld [vmem:[%s1 + $0xbc] sm:$0xf]
    %v36 = vld [vmem:[%s1 + $0xd8] sm:$0xff]
    %v37 = vld [vmem:[%s1 + $0xe0] sm:$0xf]
    %v38 = vld [vmem:[%s1 + $0xfc] sm:$0xff]
    %v39 = vld [vmem:[%s1 + $0x104] sm:$0xf]
    %v40 = vld [vmem:[%s2] sm:$0x7]
    %v42 = vlaneseq
    %v43 = vshrl.u32 %v42, 7
    %v44 = vsub.s32 0, %v43
    %v45 = vrot.slane %v40, %v44
    %v46 = vlaneseq
    %v47 = vshrl.u32 %v46, 7
    %v48 = vsub.s32 1, %v47
    %v49 = vrot.slane %v40, %v48
    %v50 = vlaneseq
    %v51 = vshrl.u32 %v50, 7
    %v52 = vsub.s32 2, %v51
    %v53 = vrot.slane %v40, %v52
    %v59 = vunpack.c.l.b16 %v22
    %v60 = vunpack.c.l.b16 %v23
    %v61 = vpack.c.b16 %v60, %v59
    %v78 = vunpack.c.l.b16 %v24
    %v79 = vunpack.c.h.b16 %v24
    %v80 = vunpack.c.l.b16 %v25
    %v81 = vunpack.c.l.b16 %v26
    %v82 = vunpack.c.h.b16 %v26
    %v83 = vunpack.c.l.b16 %v27
    %v84 = vunpack.c.l.b16 %v28
    %v85 = vunpack.c.h.b16 %v28
    %v86 = vunpack.c.l.b16 %v29
    %v87 = vunpack.c.l.b16 %v30
    %v88 = vunpack.c.h.b16 %v30
    %v89 = vunpack.c.l.b16 %v31
    %v90 = vunpack.c.l.b16 %v32
    %v91 = vunpack.c.h.b16 %v32
    %v92 = vunpack.c.l.b16 %v33
    %v93 = vunpack.c.l.b16 %v34
    %v94 = vunpack.c.h.b16 %v34
    %v95 = vunpack.c.l.b16 %v35
    %v96 = vunpack.c.l.b16 %v36
    %v97 = vunpack.c.h.b16 %v36
    %v98 = vunpack.c.l.b16 %v37
    %v99 = vunpack.c.l.b16 %v38
    %v100 = vunpack.c.h.b16 %v38
    %v101 = vunpack.c.l.b16 %v39
    %v102 = vpack.c.b16 %v81, %v78
    %v103 = vpack.c.b16 %v82, %v79
    %v104 = vpack.c.b16 %v83, %v80
    %v105 = vpack.c.b16 %v87, %v84
    %v106 = vpack.c.b16 %v88, %v85
    %v107 = vpack.c.b16 %v89, %v86
    %v108 = vpack.c.b16 %v93, %v90
    %v109 = vpack.c.b16 %v94, %v91
    %v110 = vpack.c.b16 %v95, %v92
    %v111 = vpack.c.b16 %v99, %v96
    %v112 = vpack.c.b16 %v100, %v97
    %v113 = vpack.c.b16 %v101, %v98
    %vm126 = vcmask 523264
    %v128 = vsel %vm126, %v61, 0
    %130 = vmatprep.subr.bf16.mxu0 %v103
    %131 = vmatpush1.bf16.msra.mxu0 %v102
    %132 = vmatprep.subr.bf16.mxu0 %v106
    %133 = vmatpush1.bf16.msra.mxu0 %v105
    %134 = vmatprep.subr.bf16.mxu0 %v109
    %135 = vmatpush1.bf16.msra.mxu0 %v108
    %136 = vmatprep.subr.bf16.mxu0 %v112
    %137 = vmatpush1.bf16.msra.mxu0 %v111
    %138 = vmatprep.subr.bf16.mxu0 0
    %139 = vmatpush1.bf16.msra.mxu0 0
    %140 = vmatprep.subr.bf16.mxu0 0
    %141 = vmatpush1.bf16.msra.mxu0 0
    %142 = vmatprep.subr.bf16.mxu0 0
    %143 = vmatpush1.bf16.msra.mxu0 0
    %144 = vmatprep.subr.bf16.mxu0 0
    %145 = vmatpush1.bf16.msra.mxu0 0
    %146 = vmatprep.subr.bf16.mxu0 0
    %147 = vmatpush1.bf16.msra.mxu0 0
    %148 = vmatprep.subr.bf16.mxu0 0
    %149 = vmatpush1.bf16.msra.mxu0 0
    %150 = vmatprep.subr.bf16.mxu0 0
    %151 = vmatpush1.bf16.msra.mxu0 0
    %152 = vmatprep.subr.bf16.mxu0 0
    %153 = vmatpush1.bf16.msra.mxu0 0
    %154 = vmatprep.subr.bf16.mxu0 0
    %155 = vmatpush1.bf16.msra.mxu0 0
    %156 = vmatprep.subr.bf16.mxu0 0
    %157 = vmatpush1.bf16.msra.mxu0 0
    %158 = vmatprep.subr.bf16.mxu0 0
    %159 = vmatpush1.bf16.msra.mxu0 0
    %160 = vmatprep.subr.bf16.mxu0 0
    %161 = vmatpush1.bf16.msra.mxu0 0
    %162 = vmatprep.mubr.bf16.mxu0 0
    %163 = vmatmul.mubr.bf16.gmra.mrb[0].mxu0 %v128
    %v164 = vpop.f32.mrb[0].mxu0
    %v165 = vadd.f32 %v45, %v164
    %v166 = vpop.f32.mrb[0].mxu0
    %v167 = vadd.f32 %v49, %v166
    %v168 = vpop.f32.mrb[0].mxu0
    %v169 = vadd.f32 %v45, %v168
    %v170 = vpop.f32.mrb[0].mxu0
    %v171 = vadd.f32 %v49, %v170
    %172 = vdwg.mxu0
    %173 = vmatprep.subr.bf16.mxu0 0
    %174 = vmatpush1.bf16.msra.mxu0 %v104
    %175 = vmatprep.subr.bf16.mxu0 0
    %176 = vmatpush1.bf16.msra.mxu0 %v107
    %177 = vmatprep.subr.bf16.mxu0 0
    %178 = vmatpush1.bf16.msra.mxu0 %v110
    %179 = vmatprep.subr.bf16.mxu0 0
    %180 = vmatpush1.bf16.msra.mxu0 %v113
    %181 = vmatprep.subr.bf16.mxu0 0
    %182 = vmatpush1.bf16.msra.mxu0 0
    %183 = vmatprep.subr.bf16.mxu0 0
    %184 = vmatpush1.bf16.msra.mxu0 0
    %185 = vmatprep.subr.bf16.mxu0 0
    %186 = vmatpush1.bf16.msra.mxu0 0
    %187 = vmatprep.subr.bf16.mxu0 0
    %188 = vmatpush1.bf16.msra.mxu0 0
    %189 = vmatprep.subr.bf16.mxu0 0
    %190 = vmatpush1.bf16.msra.mxu0 0
    %191 = vmatprep.subr.bf16.mxu0 0
    %192 = vmatpush1.bf16.msra.mxu0 0
    %193 = vmatprep.subr.bf16.mxu0 0
    %194 = vmatpush1.bf16.msra.mxu0 0
    %195 = vmatprep.subr.bf16.mxu0 0
    %196 = vmatpush1.bf16.msra.mxu0 0
    %197 = vmatprep.subr.bf16.mxu0 0
    %198 = vmatpush1.bf16.msra.mxu0 0
    %199 = vmatprep.subr.bf16.mxu0 0
    %200 = vmatpush1.bf16.msra.mxu0 0
    %201 = vmatprep.subr.bf16.mxu0 0
    %202 = vmatpush1.bf16.msra.mxu0 0
    %203 = vmatprep.subr.bf16.mxu0 0
    %204 = vmatpush1.bf16.msra.mxu0 0
    %205 = vmatprep.mubr.bf16.mxu0 0
    %206 = vmatmul.mubr.bf16.gmra.mrb[0].mxu0 %v128
    %v207 = vpop.f32.mrb[0].mxu0
    %v208 = vadd.f32 %v53, %v207
    %v209 = vpop.f32.mrb[0].mxu0
    %v210 = vpop.f32.mrb[0].mxu0
    %v211 = vadd.f32 %v53, %v210
    %v212 = vpop.f32.mrb[0].mxu0
    %213 = vdwg.mxu0
    %v214 = vmax.f32 %v165, 0.0
    %v215 = vmax.f32 %v167, 0.0
    %v216 = vmax.f32 %v208, 0.0
    %v217 = vmax.f32 %v169, 0.0
    %v218 = vmax.f32 %v171, 0.0
    %v219 = vmax.f32 %v211, 0.0
    %v220 = vpack.c.bf16 %v217, %v214
    %v221 = vpack.c.bf16 %v218, %v215
    %v222 = vpack.c.bf16 %v219, %v216
    %v223 = vld [vmem:[%s3] sm:$0xf]
    %v224 = vld [vmem:[%s3 + $0x4] sm:$0xf]
    %v225 = vld [vmem:[%s3 + $0x8] sm:$0xf]
    %v226 = vld [vmem:[%s3 + $0xc] sm:$0xf]
    %v227 = vld [vmem:[%s3 + $0x10] sm:$0xf]
    %v228 = vld [vmem:[%s3 + $0x14] sm:$0xf]
    %v229 = vld [vmem:[%s3 + $0x18] sm:$0xf]
    %v230 = vld [vmem:[%s3 + $0x1c] sm:$0xf]
    %v231 = vld [vmem:[%s3 + $0x20] sm:$0xf]
    %v232 = vld [vmem:[%s3 + $0x24] sm:$0xf]
    %v233 = vld [vmem:[%s3 + $0x28] sm:$0xf]
    %v234 = vld [vmem:[%s3 + $0x2c] sm:$0xf]
    %v235 = vld [vmem:[%s3 + $0x30] sm:$0xf]
    %v236 = vld [vmem:[%s3 + $0x34] sm:$0xf]
    %v237 = vld [vmem:[%s3 + $0x38] sm:$0xf]
    %v238 = vld [vmem:[%s3 + $0x3c] sm:$0xf]
    %v239 = vld [vmem:[%s3 + $0x40] sm:$0xf]
    %v240 = vld [vmem:[%s3 + $0x44] sm:$0xf]
    %v241 = vld [vmem:[%s3 + $0x48] sm:$0xf]
    %v242 = vld [vmem:[%s3 + $0x4c] sm:$0xf]
    %v243 = vld [vmem:[%s3 + $0x50] sm:$0xf]
    %v244 = vld [vmem:[%s3 + $0x54] sm:$0xf]
    %v245 = vld [vmem:[%s3 + $0x58] sm:$0xf]
    %v246 = vld [vmem:[%s3 + $0x5c] sm:$0xf]
    %v247 = vld [vmem:[%s3 + $0x60] sm:$0xf]
    %v248 = vld [vmem:[%s3 + $0x64] sm:$0xf]
    %v249 = vld [vmem:[%s3 + $0x68] sm:$0xf]
    %v250 = vld [vmem:[%s3 + $0x6c] sm:$0xf]
    %v251 = vld [vmem:[%s3 + $0x70] sm:$0xf]
    %v252 = vld [vmem:[%s3 + $0x74] sm:$0xf]
    %v253 = vld [vmem:[%s3 + $0x78] sm:$0xf]
    %v254 = vld [vmem:[%s3 + $0x7c] sm:$0xf]
    %v255 = vld [vmem:[%s3 + $0x80] sm:$0xf]
    %v256 = vld [vmem:[%s3 + $0x84] sm:$0xf]
    %v257 = vld [vmem:[%s3 + $0x88] sm:$0xf]
    %v258 = vld [vmem:[%s3 + $0x8c] sm:$0xf]
    %v259 = vld [vmem:[%s3 + $0x90] sm:$0xf]
    %v260 = vld [vmem:[%s3 + $0x94] sm:$0xf]
    %v261 = vld [vmem:[%s3 + $0x98] sm:$0xf]
    %v262 = vld [vmem:[%s3 + $0x9c] sm:$0xf]
    %v263 = vld [vmem:[%s3 + $0xa0] sm:$0xf]
    %v264 = vld [vmem:[%s3 + $0xa4] sm:$0xf]
    %v265 = vld [vmem:[%s3 + $0xa8] sm:$0xf]
    %v266 = vld [vmem:[%s3 + $0xac] sm:$0xf]
    %v267 = vld [vmem:[%s3 + $0xb0] sm:$0xf]
    %v268 = vld [vmem:[%s3 + $0xb4] sm:$0xf]
    %v269 = vld [vmem:[%s3 + $0xb8] sm:$0xf]
    %v270 = vld [vmem:[%s3 + $0xbc] sm:$0xf]
    %v271 = vld [vmem:[%s1 + $0xc] sm:$0xff]
    %v272 = vld [vmem:[%s1 + $0x14] sm:$0xf]
    %v273 = vld [vmem:[%s1 + $0x30] sm:$0xff]
    %v274 = vld [vmem:[%s1 + $0x38] sm:$0xf]
    %v275 = vld [vmem:[%s1 + $0x54] sm:$0xff]
    %v276 = vld [vmem:[%s1 + $0x5c] sm:$0xf]
    %v277 = vld [vmem:[%s1 + $0x78] sm:$0xff]
    %v278 = vld [vmem:[%s1 + $0x80] sm:$0xf]
    %v279 = vld [vmem:[%s1 + $0x9c] sm:$0xff]
    %v280 = vld [vmem:[%s1 + $0xa4] sm:$0xf]
    %v281 = vld [vmem:[%s1 + $0xc0] sm:$0xff]
    %v282 = vld [vmem:[%s1 + $0xc8] sm:$0xf]
    %v283 = vld [vmem:[%s1 + $0xe4] sm:$0xff]
    %v284 = vld [vmem:[%s1 + $0xec] sm:$0xf]
    %v285 = vld [vmem:[%s1 + $0x108] sm:$0xff]
    %v286 = vld [vmem:[%s1 + $0x110] sm:$0xf]
    %v287 = vld [vmem:[%s2 + $0x3] sm:$0x7]
    %v289 = vlaneseq
    %v290 = vshrl.u32 %v289, 7
    %v291 = vsub.s32 0, %v290
    %v292 = vrot.slane %v287, %v291
    %v293 = vlaneseq
    %v294 = vshrl.u32 %v293, 7
    %v295 = vsub.s32 1, %v294
    %v296 = vrot.slane %v287, %v295
    %v297 = vlaneseq
    %v298 = vshrl.u32 %v297, 7
    %v299 = vsub.s32 2, %v298
    %v300 = vrot.slane %v287, %v299
    %v320 = vunpack.c.l.b16 %v271
    %v321 = vunpack.c.h.b16 %v271
    %v322 = vunpack.c.l.b16 %v272
    %v323 = vunpack.c.l.b16 %v273
    %v324 = vunpack.c.h.b16 %v273
    %v325 = vunpack.c.l.b16 %v274
    %v326 = vunpack.c.l.b16 %v275
    %v327 = vunpack.c.h.b16 %v275
    %v328 = vunpack.c.l.b16 %v276
    %v329 = vunpack.c.l.b16 %v277
    %v330 = vunpack.c.h.b16 %v277
    %v331 = vunpack.c.l.b16 %v278
    %v332 = vunpack.c.l.b16 %v279
    %v333 = vunpack.c.h.b16 %v279
    %v334 = vunpack.c.l.b16 %v280
    %v335 = vunpack.c.l.b16 %v281
    %v336 = vunpack.c.h.b16 %v281
    %v337 = vunpack.c.l.b16 %v282
    %v338 = vunpack.c.l.b16 %v283
    %v339 = vunpack.c.h.b16 %v283
    %v340 = vunpack.c.l.b16 %v284
    %v341 = vunpack.c.l.b16 %v285
    %v342 = vunpack.c.h.b16 %v285
    %v343 = vunpack.c.l.b16 %v286
    %v344 = vpack.c.b16 %v323, %v320
    %v345 = vpack.c.b16 %v324, %v321
    %v346 = vpack.c.b16 %v325, %v322
    %v347 = vpack.c.b16 %v329, %v326
    %v348 = vpack.c.b16 %v330, %v327
    %v349 = vpack.c.b16 %v331, %v328
    %v350 = vpack.c.b16 %v335, %v332
    %v351 = vpack.c.b16 %v336, %v333
    %v352 = vpack.c.b16 %v337, %v334
    %v353 = vpack.c.b16 %v341, %v338
    %v354 = vpack.c.b16 %v342, %v339
    %v355 = vpack.c.b16 %v343, %v340
    %368 = vmatprep.subr.bf16.mxu0 %v345
    %369 = vmatpush1.bf16.msra.mxu0 %v344
    %370 = vmatprep.subr.bf16.mxu0 %v348
    %371 = vmatpush1.bf16.msra.mxu0 %v347
    %372 = vmatprep.subr.bf16.mxu0 %v351
    %373 = vmatpush1.bf16.msra.mxu0 %v350
    %374 = vmatprep.subr.bf16.mxu0 %v354
    %375 = vmatpush1.bf16.msra.mxu0 %v353
    %376 = vmatprep.subr.bf16.mxu0 0
    %377 = vmatpush1.bf16.msra.mxu0 0
    %378 = vmatprep.subr.bf16.mxu0 0
    %379 = vmatpush1.bf16.msra.mxu0 0
    %380 = vmatprep.subr.bf16.mxu0 0
    %381 = vmatpush1.bf16.msra.mxu0 0
    %382 = vmatprep.subr.bf16.mxu0 0
    %383 = vmatpush1.bf16.msra.mxu0 0
    %384 = vmatprep.subr.bf16.mxu0 0
    %385 = vmatpush1.bf16.msra.mxu0 0
    %386 = vmatprep.subr.bf16.mxu0 0
    %387 = vmatpush1.bf16.msra.mxu0 0
    %388 = vmatprep.subr.bf16.mxu0 0
    %389 = vmatpush1.bf16.msra.mxu0 0
    %390 = vmatprep.subr.bf16.mxu0 0
    %391 = vmatpush1.bf16.msra.mxu0 0
    %392 = vmatprep.subr.bf16.mxu0 0
    %393 = vmatpush1.bf16.msra.mxu0 0
    %394 = vmatprep.subr.bf16.mxu0 0
    %395 = vmatpush1.bf16.msra.mxu0 0
    %396 = vmatprep.subr.bf16.mxu0 0
    %397 = vmatpush1.bf16.msra.mxu0 0
    %398 = vmatprep.subr.bf16.mxu0 0
    %399 = vmatpush1.bf16.msra.mxu0 0
    %400 = vmatprep.mubr.bf16.mxu0 0
    %401 = vmatmul.mubr.bf16.gmra.mrb[0].mxu0 %v128
    %v402 = vpop.f32.mrb[0].mxu0
    %v403 = vadd.f32 %v292, %v402
    %v404 = vpop.f32.mrb[0].mxu0
    %v405 = vadd.f32 %v296, %v404
    %v406 = vpop.f32.mrb[0].mxu0
    %v407 = vadd.f32 %v292, %v406
    %v408 = vpop.f32.mrb[0].mxu0
    %v409 = vadd.f32 %v296, %v408
    %410 = vdwg.mxu0
    %411 = vmatprep.subr.bf16.mxu0 0
    %412 = vmatpush1.bf16.msra.mxu0 %v346
    %413 = vmatprep.subr.bf16.mxu0 0
    %414 = vmatpush1.bf16.msra.mxu0 %v349
    %415 = vmatprep.subr.bf16.mxu0 0
    %416 = vmatpush1.bf16.msra.mxu0 %v352
    %417 = vmatprep.subr.bf16.mxu0 0
    %418 = vmatpush1.bf16.msra.mxu0 %v355
    %419 = vmatprep.subr.bf16.mxu0 0
    %420 = vmatpush1.bf16.msra.mxu0 0
    %421 = vmatprep.subr.bf16.mxu0 0
    %422 = vmatpush1.bf16.msra.mxu0 0
    %423 = vmatprep.subr.bf16.mxu0 0
    %424 = vmatpush1.bf16.msra.mxu0 0
    %425 = vmatprep.subr.bf16.mxu0 0
    %426 = vmatpush1.bf16.msra.mxu0 0
    %427 = vmatprep.subr.bf16.mxu0 0
    %428 = vmatpush1.bf16.msra.mxu0 0
    %429 = vmatprep.subr.bf16.mxu0 0
    %430 = vmatpush1.bf16.msra.mxu0 0
    %431 = vmatprep.subr.bf16.mxu0 0
    %432 = vmatpush1.bf16.msra.mxu0 0
    %433 = vmatprep.subr.bf16.mxu0 0
    %434 = vmatpush1.bf16.msra.mxu0 0
    %435 = vmatprep.subr.bf16.mxu0 0
    %436 = vmatpush1.bf16.msra.mxu0 0
    %437 = vmatprep.subr.bf16.mxu0 0
    %438 = vmatpush1.bf16.msra.mxu0 0
    %439 = vmatprep.subr.bf16.mxu0 0
    %440 = vmatpush1.bf16.msra.mxu0 0
    %441 = vmatprep.subr.bf16.mxu0 0
    %442 = vmatpush1.bf16.msra.mxu0 0
    %443 = vmatprep.mubr.bf16.mxu0 0
    %444 = vmatmul.mubr.bf16.gmra.mrb[0].mxu0 %v128
    %v445 = vpop.f32.mrb[0].mxu0
    %v446 = vadd.f32 %v300, %v445
    %v447 = vpop.f32.mrb[0].mxu0
    %v448 = vpop.f32.mrb[0].mxu0
    %v449 = vadd.f32 %v300, %v448
    %v450 = vpop.f32.mrb[0].mxu0
    %451 = vdwg.mxu0
    %v452 = vmax.f32 %v403, 0.0
    %v453 = vmax.f32 %v405, 0.0
    %v454 = vmax.f32 %v446, 0.0
    %v455 = vmax.f32 %v407, 0.0
    %v456 = vmax.f32 %v409, 0.0
    %v457 = vmax.f32 %v449, 0.0
    %v458 = vpack.c.bf16 %v455, %v452
    %v459 = vpack.c.bf16 %v456, %v453
    %v460 = vpack.c.bf16 %v457, %v454
    %v461 = vld [vmem:[%s3 + $0xc0] sm:$0xf]
    %v462 = vld [vmem:[%s3 + $0xc4] sm:$0xf]
    %v463 = vld [vmem:[%s3 + $0xc8] sm:$0xf]
    %v464 = vld [vmem:[%s3 + $0xcc] sm:$0xf]
    %v465 = vld [vmem:[%s3 + $0xd0] sm:$0xf]
    %v466 = vld [vmem:[%s3 + $0xd4] sm:$0xf]
    %v467 = vld [vmem:[%s3 + $0xd8] sm:$0xf]
    %v468 = vld [vmem:[%s3 + $0xdc] sm:$0xf]
    %v469 = vld [vmem:[%s3 + $0xe0] sm:$0xf]
    %v470 = vld [vmem:[%s3 + $0xe4] sm:$0xf]
    %v471 = vld [vmem:[%s3 + $0xe8] sm:$0xf]
    %v472 = vld [vmem:[%s3 + $0xec] sm:$0xf]
    %v473 = vld [vmem:[%s3 + $0xf0] sm:$0xf]
    %v474 = vld [vmem:[%s3 + $0xf4] sm:$0xf]
    %v475 = vld [vmem:[%s3 + $0xf8] sm:$0xf]
    %v476 = vld [vmem:[%s3 + $0xfc] sm:$0xf]
    %v477 = vld [vmem:[%s3 + $0x100] sm:$0xf]
    %v478 = vld [vmem:[%s3 + $0x104] sm:$0xf]
    %v479 = vld [vmem:[%s3 + $0x108] sm:$0xf]
    %v480 = vld [vmem:[%s3 + $0x10c] sm:$0xf]
    %v481 = vld [vmem:[%s3 + $0x110] sm:$0xf]
    %v482 = vld [vmem:[%s3 + $0x114] sm:$0xf]
    %v483 = vld [vmem:[%s3 + $0x118] sm:$0xf]
    %v484 = vld [vmem:[%s3 + $0x11c] sm:$0xf]
    %v485 = vld [vmem:[%s3 + $0x120] sm:$0xf]
    %v486 = vld [vmem:[%s3 + $0x124] sm:$0xf]
    %v487 = vld [vmem:[%s3 + $0x128] sm:$0xf]
    %v488 = vld [vmem:[%s3 + $0x12c] sm:$0xf]
    %v489 = vld [vmem:[%s3 + $0x130] sm:$0xf]
    %v490 = vld [vmem:[%s3 + $0x134] sm:$0xf]
    %v491 = vld [vmem:[%s3 + $0x138] sm:$0xf]
    %v492 = vld [vmem:[%s3 + $0x13c] sm:$0xf]
    %v493 = vld [vmem:[%s3 + $0x140] sm:$0xf]
    %v494 = vld [vmem:[%s3 + $0x144] sm:$0xf]
    %v495 = vld [vmem:[%s3 + $0x148] sm:$0xf]
    %v496 = vld [vmem:[%s3 + $0x14c] sm:$0xf]
    %v497 = vld [vmem:[%s3 + $0x150] sm:$0xf]
    %v498 = vld [vmem:[%s3 + $0x154] sm:$0xf]
    %v499 = vld [vmem:[%s3 + $0x158] sm:$0xf]
    %v500 = vld [vmem:[%s3 + $0x15c] sm:$0xf]
    %v501 = vld [vmem:[%s3 + $0x160] sm:$0xf]
    %v502 = vld [vmem:[%s3 + $0x164] sm:$0xf]
    %v503 = vld [vmem:[%s3 + $0x168] sm:$0xf]
    %v504 = vld [vmem:[%s3 + $0x16c] sm:$0xf]
    %v505 = vld [vmem:[%s3 + $0x170] sm:$0xf]
    %v506 = vld [vmem:[%s3 + $0x174] sm:$0xf]
    %v507 = vld [vmem:[%s3 + $0x178] sm:$0xf]
    %v508 = vld [vmem:[%s3 + $0x17c] sm:$0xf]
    %v557 = vunpack.c.l.b16 %v461
    %v558 = vunpack.c.l.b16 %v462
    %v559 = vunpack.c.l.b16 %v463
    %v560 = vunpack.c.l.b16 %v464
    %v561 = vunpack.c.l.b16 %v465
    %v562 = vunpack.c.l.b16 %v466
    %v563 = vunpack.c.l.b16 %v467
    %v564 = vunpack.c.l.b16 %v468
    %v565 = vunpack.c.l.b16 %v469
    %v566 = vunpack.c.l.b16 %v470
    %v567 = vunpack.c.l.b16 %v471
    %v568 = vunpack.c.l.b16 %v472
    %v569 = vunpack.c.l.b16 %v473
    %v570 = vunpack.c.l.b16 %v474
    %v571 = vunpack.c.l.b16 %v475
    %v572 = vunpack.c.l.b16 %v476
    %v573 = vunpack.c.l.b16 %v477
    %v574 = vunpack.c.l.b16 %v478
    %v575 = vunpack.c.l.b16 %v479
    %v576 = vunpack.c.l.b16 %v480
    %v577 = vunpack.c.l.b16 %v481
    %v578 = vunpack.c.l.b16 %v482
    %v579 = vunpack.c.l.b16 %v483
    %v580 = vunpack.c.l.b16 %v484
    %v581 = vunpack.c.l.b16 %v485
    %v582 = vunpack.c.l.b16 %v486
    %v583 = vunpack.c.l.b16 %v487
    %v584 = vunpack.c.l.b16 %v488
    %v585 = vunpack.c.l.b16 %v489
    %v586 = vunpack.c.l.b16 %v490
    %v587 = vunpack.c.l.b16 %v491
    %v588 = vunpack.c.l.b16 %v492
    %v589 = vunpack.c.l.b16 %v493
    %v590 = vunpack.c.l.b16 %v494
    %v591 = vunpack.c.l.b16 %v495
    %v592 = vunpack.c.l.b16 %v496
    %v593 = vunpack.c.l.b16 %v497
    %v594 = vunpack.c.l.b16 %v498
    %v595 = vunpack.c.l.b16 %v499
    %v596 = vunpack.c.l.b16 %v500
    %v597 = vunpack.c.l.b16 %v501
    %v598 = vunpack.c.l.b16 %v502
    %v599 = vunpack.c.l.b16 %v503
    %v600 = vunpack.c.l.b16 %v504
    %v601 = vunpack.c.l.b16 %v505
    %v602 = vunpack.c.l.b16 %v506
    %v603 = vunpack.c.l.b16 %v507
    %v604 = vunpack.c.l.b16 %v508
    %v605 = vpack.c.b16 %v558, %v557
    %v606 = vpack.c.b16 %v560, %v559
    %v607 = vpack.c.b16 %v562, %v561
    %v608 = vpack.c.b16 %v564, %v563
    %v609 = vpack.c.b16 %v566, %v565
    %v610 = vpack.c.b16 %v568, %v567
    %v611 = vpack.c.b16 %v570, %v569
    %v612 = vpack.c.b16 %v572, %v571
    %v613 = vpack.c.b16 %v574, %v573
    %v614 = vpack.c.b16 %v576, %v575
    %v615 = vpack.c.b16 %v578, %v577
    %v616 = vpack.c.b16 %v580, %v579
    %v617 = vpack.c.b16 %v582, %v581
    %v618 = vpack.c.b16 %v584, %v583
    %v619 = vpack.c.b16 %v586, %v585
    %v620 = vpack.c.b16 %v588, %v587
    %v621 = vpack.c.b16 %v590, %v589
    %v622 = vpack.c.b16 %v592, %v591
    %v623 = vpack.c.b16 %v594, %v593
    %v624 = vpack.c.b16 %v596, %v595
    %v625 = vpack.c.b16 %v598, %v597
    %v626 = vpack.c.b16 %v600, %v599
    %v627 = vpack.c.b16 %v602, %v601
    %v628 = vpack.c.b16 %v604, %v603
    %653 = vmatprep.subr.bf16.mxu0 0
    %654 = vmatpush1.bf16.msra.mxu0 %v605
    %655 = vmatprep.subr.bf16.mxu0 0
    %656 = vmatpush1.bf16.msra.mxu0 %v606
    %657 = vmatprep.subr.bf16.mxu0 0
    %658 = vmatpush1.bf16.msra.mxu0 %v607
    %659 = vmatprep.subr.bf16.mxu0 0
    %660 = vmatpush1.bf16.msra.mxu0 %v608
    %661 = vmatprep.subr.bf16.mxu0 0
    %662 = vmatpush1.bf16.msra.mxu0 %v609
    %663 = vmatprep.subr.bf16.mxu0 0
    %664 = vmatpush1.bf16.msra.mxu0 %v610
    %665 = vmatprep.subr.bf16.mxu0 0
    %666 = vmatpush1.bf16.msra.mxu0 %v611
    %667 = vmatprep.subr.bf16.mxu0 0
    %668 = vmatpush1.bf16.msra.mxu0 %v612
    %669 = vmatprep.subr.bf16.mxu0 0
    %670 = vmatpush1.bf16.msra.mxu0 %v613
    %671 = vmatprep.subr.bf16.mxu0 0
    %672 = vmatpush1.bf16.msra.mxu0 %v614
    %673 = vmatprep.subr.bf16.mxu0 0
    %674 = vmatpush1.bf16.msra.mxu0 %v615
    %675 = vmatprep.subr.bf16.mxu0 0
    %676 = vmatpush1.bf16.msra.mxu0 %v616
    %677 = vmatprep.subr.bf16.mxu0 0
    %678 = vmatpush1.bf16.msra.mxu0 %v617
    %679 = vmatprep.subr.bf16.mxu0 0
    %680 = vmatpush1.bf16.msra.mxu0 %v618
    %681 = vmatprep.subr.bf16.mxu0 0
    %682 = vmatpush1.bf16.msra.mxu0 %v619
    %683 = vmatprep.subr.bf16.mxu0 0
    %684 = vmatpush1.bf16.msra.mxu0 %v620
    %685 = vmatprep.mubr.bf16.mxu0 %v459
    %686 = vmatmul.mubr.bf16.gmra.mrb[0].mxu0 %v458
    %v687 = vpop.f32.mrb[0].mxu0
    %v688 = vadd.f32 0.0, %v687
    %v689 = vpop.f32.mrb[0].mxu0
    %v690 = vpop.f32.mrb[0].mxu0
    %v691 = vadd.f32 0.0, %v690
    %v692 = vpop.f32.mrb[0].mxu0
    %693 = vdwg.mxu0
    %694 = vmatprep.subr.bf16.mxu0 0
    %695 = vmatpush1.bf16.msra.mxu0 %v621
    %696 = vmatprep.subr.bf16.mxu0 0
    %697 = vmatpush1.bf16.msra.mxu0 %v622
    %698 = vmatprep.subr.bf16.mxu0 0
    %699 = vmatpush1.bf16.msra.mxu0 %v623
    %700 = vmatprep.subr.bf16.mxu0 0
    %701 = vmatpush1.bf16.msra.mxu0 %v624
    %702 = vmatprep.subr.bf16.mxu0 0
    %703 = vmatpush1.bf16.msra.mxu0 %v625
    %704 = vmatprep.subr.bf16.mxu0 0
    %705 = vmatpush1.bf16.msra.mxu0 %v626
    %706 = vmatprep.subr.bf16.mxu0 0
    %707 = vmatpush1.bf16.msra.mxu0 %v627
    %708 = vmatprep.subr.bf16.mxu0 0
    %709 = vmatpush1.bf16.msra.mxu0 %v628
    %710 = vmatprep.subr.bf16.mxu0 0
    %711 = vmatpush1.bf16.msra.mxu0 0
    %712 = vmatprep.subr.bf16.mxu0 0
    %713 = vmatpush1.bf16.msra.mxu0 0
    %714 = vmatprep.subr.bf16.mxu0 0
    %715 = vmatpush1.bf16.msra.mxu0 0
    %716 = vmatprep.subr.bf16.mxu0 0
    %717 = vmatpush1.bf16.msra.mxu0 0
    %718 = vmatprep.subr.bf16.mxu0 0
    %719 = vmatpush1.bf16.msra.mxu0 0
    %720 = vmatprep.subr.bf16.mxu0 0
    %721 = vmatpush1.bf16.msra.mxu0 0
    %722 = vmatprep.subr.bf16.mxu0 0
    %723 = vmatpush1.bf16.msra.mxu0 0
    %724 = vmatprep.subr.bf16.mxu0 0
    %725 = vmatpush1.bf16.msra.mxu0 0
    %726 = vmatprep.mubr.bf16.mxu0 0
    %727 = vmatmul.mubr.bf16.gmra.mrb[0].mxu0 %v460
    %v728 = vpop.f32.mrb[0].mxu0
    %v729 = vadd.f32 %v688, %v728
    %v730 = vpop.f32.mrb[0].mxu0
    %v731 = vpop.f32.mrb[0].mxu0
    %v732 = vadd.f32 %v691, %v731
    %v733 = vpop.f32.mrb[0].mxu0
    %734 = vdwg.mxu0
    %v783 = vunpack.c.l.b16 %v223
    %v784 = vunpack.c.l.b16 %v224
    %v785 = vunpack.c.l.b16 %v225
    %v786 = vunpack.c.l.b16 %v226
    %v787 = vunpack.c.l.b16 %v227
    %v788 = vunpack.c.l.b16 %v228
    %v789 = vunpack.c.l.b16 %v229
    %v790 = vunpack.c.l.b16 %v230
    %v791 = vunpack.c.l.b16 %v231
    %v792 = vunpack.c.l.b16 %v232
    %v793 = vunpack.c.l.b16 %v233
    %v794 = vunpack.c.l.b16 %v234
    %v795 = vunpack.c.l.b16 %v235
    %v796 = vunpack.c.l.b16 %v236
    %v797 = vunpack.c.l.b16 %v237
    %v798 = vunpack.c.l.b16 %v238
    %v799 = vunpack.c.l.b16 %v239
    %v800 = vunpack.c.l.b16 %v240
    %v801 = vunpack.c.l.b16 %v241
    %v802 = vunpack.c.l.b16 %v242
    %v803 = vunpack.c.l.b16 %v243
    %v804 = vunpack.c.l.b16 %v244
    %v805 = vunpack.c.l.b16 %v245
    %v806 = vunpack.c.l.b16 %v246
    %v807 = vunpack.c.l.b16 %v247
    %v808 = vunpack.c.l.b16 %v248
    %v809 = vunpack.c.l.b16 %v249
    %v810 = vunpack.c.l.b16 %v250
    %v811 = vunpack.c.l.b16 %v251
    %v812 = vunpack.c.l.b16 %v252
    %v813 = vunpack.c.l.b16 %v253
    %v814 = vunpack.c.l.b16 %v254
    %v815 = vunpack.c.l.b16 %v255
    %v816 = vunpack.c.l.b16 %v256
    %v817 = vunpack.c.l.b16 %v257
    %v818 = vunpack.c.l.b16 %v258
    %v819 = vunpack.c.l.b16 %v259
    %v820 = vunpack.c.l.b16 %v260
    %v821 = vunpack.c.l.b16 %v261
    %v822 = vunpack.c.l.b16 %v262
    %v823 = vunpack.c.l.b16 %v263
    %v824 = vunpack.c.l.b16 %v264
    %v825 = vunpack.c.l.b16 %v265
    %v826 = vunpack.c.l.b16 %v266
    %v827 = vunpack.c.l.b16 %v267
    %v828 = vunpack.c.l.b16 %v268
    %v829 = vunpack.c.l.b16 %v269
    %v830 = vunpack.c.l.b16 %v270
    %v831 = vpack.c.b16 %v784, %v783
    %v832 = vpack.c.b16 %v786, %v785
    %v833 = vpack.c.b16 %v788, %v787
    %v834 = vpack.c.b16 %v790, %v789
    %v835 = vpack.c.b16 %v792, %v791
    %v836 = vpack.c.b16 %v794, %v793
    %v837 = vpack.c.b16 %v796, %v795
    %v838 = vpack.c.b16 %v798, %v797
    %v839 = vpack.c.b16 %v800, %v799
    %v840 = vpack.c.b16 %v802, %v801
    %v841 = vpack.c.b16 %v804, %v803
    %v842 = vpack.c.b16 %v806, %v805
    %v843 = vpack.c.b16 %v808, %v807
    %v844 = vpack.c.b16 %v810, %v809
    %v845 = vpack.c.b16 %v812, %v811
    %v846 = vpack.c.b16 %v814, %v813
    %v847 = vpack.c.b16 %v816, %v815
    %v848 = vpack.c.b16 %v818, %v817
    %v849 = vpack.c.b16 %v820, %v819
    %v850 = vpack.c.b16 %v822, %v821
    %v851 = vpack.c.b16 %v824, %v823
    %v852 = vpack.c.b16 %v826, %v825
    %v853 = vpack.c.b16 %v828, %v827
    %v854 = vpack.c.b16 %v830, %v829
    %879 = vmatprep.subr.bf16.mxu0 0
    %880 = vmatpush1.bf16.msra.mxu0 %v831
    %881 = vmatprep.subr.bf16.mxu0 0
    %882 = vmatpush1.bf16.msra.mxu0 %v832
    %883 = vmatprep.subr.bf16.mxu0 0
    %884 = vmatpush1.bf16.msra.mxu0 %v833
    %885 = vmatprep.subr.bf16.mxu0 0
    %886 = vmatpush1.bf16.msra.mxu0 %v834
    %887 = vmatprep.subr.bf16.mxu0 0
    %888 = vmatpush1.bf16.msra.mxu0 %v835
    %889 = vmatprep.subr.bf16.mxu0 0
    %890 = vmatpush1.bf16.msra.mxu0 %v836
    %891 = vmatprep.subr.bf16.mxu0 0
    %892 = vmatpush1.bf16.msra.mxu0 %v837
    %893 = vmatprep.subr.bf16.mxu0 0
    %894 = vmatpush1.bf16.msra.mxu0 %v838
    %895 = vmatprep.subr.bf16.mxu0 0
    %896 = vmatpush1.bf16.msra.mxu0 %v839
    %897 = vmatprep.subr.bf16.mxu0 0
    %898 = vmatpush1.bf16.msra.mxu0 %v840
    %899 = vmatprep.subr.bf16.mxu0 0
    %900 = vmatpush1.bf16.msra.mxu0 %v841
    %901 = vmatprep.subr.bf16.mxu0 0
    %902 = vmatpush1.bf16.msra.mxu0 %v842
    %903 = vmatprep.subr.bf16.mxu0 0
    %904 = vmatpush1.bf16.msra.mxu0 %v843
    %905 = vmatprep.subr.bf16.mxu0 0
    %906 = vmatpush1.bf16.msra.mxu0 %v844
    %907 = vmatprep.subr.bf16.mxu0 0
    %908 = vmatpush1.bf16.msra.mxu0 %v845
    %909 = vmatprep.subr.bf16.mxu0 0
    %910 = vmatpush1.bf16.msra.mxu0 %v846
    %911 = vmatprep.mubr.bf16.mxu0 %v221
    %912 = vmatmul.mubr.bf16.gmra.mrb[0].mxu0 %v220
    %v913 = vpop.f32.mrb[0].mxu0
    %v914 = vadd.f32 %v729, %v913
    %v915 = vpop.f32.mrb[0].mxu0
    %v916 = vpop.f32.mrb[0].mxu0
    %v917 = vadd.f32 %v732, %v916
    %v918 = vpop.f32.mrb[0].mxu0
    %919 = vdwg.mxu0
    %920 = vmatprep.subr.bf16.mxu0 0
    %921 = vmatpush1.bf16.msra.mxu0 %v847
    %922 = vmatprep.subr.bf16.mxu0 0
    %923 = vmatpush1.bf16.msra.mxu0 %v848
    %924 = vmatprep.subr.bf16.mxu0 0
    %925 = vmatpush1.bf16.msra.mxu0 %v849
    %926 = vmatprep.subr.bf16.mxu0 0
    %927 = vmatpush1.bf16.msra.mxu0 %v850
    %928 = vmatprep.subr.bf16.mxu0 0
    %929 = vmatpush1.bf16.msra.mxu0 %v851
    %930 = vmatprep.subr.bf16.mxu0 0
    %931 = vmatpush1.bf16.msra.mxu0 %v852
    %932 = vmatprep.subr.bf16.mxu0 0
    %933 = vmatpush1.bf16.msra.mxu0 %v853
    %934 = vmatprep.subr.bf16.mxu0 0
    %935 = vmatpush1.bf16.msra.mxu0 %v854
    %936 = vmatprep.subr.bf16.mxu0 0
    %937 = vmatpush1.bf16.msra.mxu0 0
    %938 = vmatprep.subr.bf16.mxu0 0
    %939 = vmatpush1.bf16.msra.mxu0 0
    %940 = vmatprep.subr.bf16.mxu0 0
    %941 = vmatpush1.bf16.msra.mxu0 0
    %942 = vmatprep.subr.bf16.mxu0 0
    %943 = vmatpush1.bf16.msra.mxu0 0
    %944 = vmatprep.subr.bf16.mxu0 0
    %945 = vmatpush1.bf16.msra.mxu0 0
    %946 = vmatprep.subr.bf16.mxu0 0
    %947 = vmatpush1.bf16.msra.mxu0 0
    %948 = vmatprep.subr.bf16.mxu0 0
    %949 = vmatpush1.bf16.msra.mxu0 0
    %950 = vmatprep.subr.bf16.mxu0 0
    %951 = vmatpush1.bf16.msra.mxu0 0
    %952 = vmatprep.mubr.bf16.mxu0 0
    %953 = vmatmul.mubr.bf16.gmra.mrb[0].mxu0 %v222
    %v954 = vpop.f32.mrb[0].mxu0
    %v955 = vadd.f32 %v914, %v954
    %v956 = vpop.f32.mrb[0].mxu0
    %v957 = vpop.f32.mrb[0].mxu0
    %v958 = vadd.f32 %v917, %v957
    %v959 = vpop.f32.mrb[0].mxu0
    %960 = vdwg.mxu0
    %v961 = vld [vmem:[%s1 + $0x18] sm:$0xff]
    %v962 = vld [vmem:[%s1 + $0x20] sm:$0xf]
    %v963 = vld [vmem:[%s1 + $0x3c] sm:$0xff]
    %v964 = vld [vmem:[%s1 + $0x44] sm:$0xf]
    %v965 = vld [vmem:[%s1 + $0x60] sm:$0xff]
    %v966 = vld [vmem:[%s1 + $0x68] sm:$0xf]
    %v967 = vld [vmem:[%s1 + $0x84] sm:$0xff]
    %v968 = vld [vmem:[%s1 + $0x8c] sm:$0xf]
    %v969 = vld [vmem:[%s1 + $0xa8] sm:$0xff]
    %v970 = vld [vmem:[%s1 + $0xb0] sm:$0xf]
    %v971 = vld [vmem:[%s1 + $0xcc] sm:$0xff]
    %v972 = vld [vmem:[%s1 + $0xd4] sm:$0xf]
    %v973 = vld [vmem:[%s1 + $0xf0] sm:$0xff]
    %v974 = vld [vmem:[%s1 + $0xf8] sm:$0xf]
    %v975 = vld [vmem:[%s1 + $0x114] sm:$0xff]
    %v976 = vld [vmem:[%s1 + $0x11c] sm:$0xf]
    %v977 = vld [vmem:[%s2 + $0x6] sm:$0x7]
    %v979 = vlaneseq
    %v980 = vshrl.u32 %v979, 7
    %v981 = vsub.s32 0, %v980
    %v982 = vrot.slane %v977, %v981
    %v983 = vlaneseq
    %v984 = vshrl.u32 %v983, 7
    %v985 = vsub.s32 1, %v984
    %v986 = vrot.slane %v977, %v985
    %v987 = vlaneseq
    %v988 = vshrl.u32 %v987, 7
    %v989 = vsub.s32 2, %v988
    %v990 = vrot.slane %v977, %v989
    %v1010 = vunpack.c.l.b16 %v961
    %v1011 = vunpack.c.h.b16 %v961
    %v1012 = vunpack.c.l.b16 %v962
    %v1013 = vunpack.c.l.b16 %v963
    %v1014 = vunpack.c.h.b16 %v963
    %v1015 = vunpack.c.l.b16 %v964
    %v1016 = vunpack.c.l.b16 %v965
    %v1017 = vunpack.c.h.b16 %v965
    %v1018 = vunpack.c.l.b16 %v966
    %v1019 = vunpack.c.l.b16 %v967
    %v1020 = vunpack.c.h.b16 %v967
    %v1021 = vunpack.c.l.b16 %v968
    %v1022 = vunpack.c.l.b16 %v969
    %v1023 = vunpack.c.h.b16 %v969
    %v1024 = vunpack.c.l.b16 %v970
    %v1025 = vunpack.c.l.b16 %v971
    %v1026 = vunpack.c.h.b16 %v971
    %v1027 = vunpack.c.l.b16 %v972
    %v1028 = vunpack.c.l.b16 %v973
    %v1029 = vunpack.c.h.b16 %v973
    %v1030 = vunpack.c.l.b16 %v974
    %v1031 = vunpack.c.l.b16 %v975
    %v1032 = vunpack.c.h.b16 %v975
    %v1033 = vunpack.c.l.b16 %v976
    %v1034 = vpack.c.b16 %v1013, %v1010
    %v1035 = vpack.c.b16 %v1014, %v1011
    %v1036 = vpack.c.b16 %v1015, %v1012
    %v1037 = vpack.c.b16 %v1019, %v1016
    %v1038 = vpack.c.b16 %v1020, %v1017
    %v1039 = vpack.c.b16 %v1021, %v1018
    %v1040 = vpack.c.b16 %v1025, %v1022
    %v1041 = vpack.c.b16 %v1026, %v1023
    %v1042 = vpack.c.b16 %v1027, %v1024
    %v1043 = vpack.c.b16 %v1031, %v1028
    %v1044 = vpack.c.b16 %v1032, %v1029
    %v1045 = vpack.c.b16 %v1033, %v1030
    %1058 = vmatprep.subr.bf16.mxu0 %v1035
    %1059 = vmatpush1.bf16.msra.mxu0 %v1034
    %1060 = vmatprep.subr.bf16.mxu0 %v1038
    %1061 = vmatpush1.bf16.msra.mxu0 %v1037
    %1062 = vmatprep.subr.bf16.mxu0 %v1041
    %1063 = vmatpush1.bf16.msra.mxu0 %v1040
    %1064 = vmatprep.subr.bf16.mxu0 %v1044
    %1065 = vmatpush1.bf16.msra.mxu0 %v1043
    %1066 = vmatprep.subr.bf16.mxu0 0
    %1067 = vmatpush1.bf16.msra.mxu0 0
    %1068 = vmatprep.subr.bf16.mxu0 0
    %1069 = vmatpush1.bf16.msra.mxu0 0
    %1070 = vmatprep.subr.bf16.mxu0 0
    %1071 = vmatpush1.bf16.msra.mxu0 0
    %1072 = vmatprep.subr.bf16.mxu0 0
    %1073 = vmatpush1.bf16.msra.mxu0 0
    %1074 = vmatprep.subr.bf16.mxu0 0
    %1075 = vmatpush1.bf16.msra.mxu0 0
    %1076 = vmatprep.subr.bf16.mxu0 0
    %1077 = vmatpush1.bf16.msra.mxu0 0
    %1078 = vmatprep.subr.bf16.mxu0 0
    %1079 = vmatpush1.bf16.msra.mxu0 0
    %1080 = vmatprep.subr.bf16.mxu0 0
    %1081 = vmatpush1.bf16.msra.mxu0 0
    %1082 = vmatprep.subr.bf16.mxu0 0
    %1083 = vmatpush1.bf16.msra.mxu0 0
    %1084 = vmatprep.subr.bf16.mxu0 0
    %1085 = vmatpush1.bf16.msra.mxu0 0
    %1086 = vmatprep.subr.bf16.mxu0 0
    %1087 = vmatpush1.bf16.msra.mxu0 0
    %1088 = vmatprep.subr.bf16.mxu0 0
    %1089 = vmatpush1.bf16.msra.mxu0 0
    %1090 = vmatprep.mubr.bf16.mxu0 0
    %1091 = vmatmul.mubr.bf16.gmra.mrb[0].mxu0 %v128
    %v1092 = vpop.f32.mrb[0].mxu0
    %v1093 = vadd.f32 %v982, %v1092
    %v1094 = vpop.f32.mrb[0].mxu0
    %v1095 = vadd.f32 %v986, %v1094
    %v1096 = vpop.f32.mrb[0].mxu0
    %v1097 = vadd.f32 %v982, %v1096
    %v1098 = vpop.f32.mrb[0].mxu0
    %v1099 = vadd.f32 %v986, %v1098
    %1100 = vdwg.mxu0
    %1101 = vmatprep.subr.bf16.mxu0 0
    %1102 = vmatpush1.bf16.msra.mxu0 %v1036
    %1103 = vmatprep.subr.bf16.mxu0 0
    %1104 = vmatpush1.bf16.msra.mxu0 %v1039
    %1105 = vmatprep.subr.bf16.mxu0 0
    %1106 = vmatpush1.bf16.msra.mxu0 %v1042
    %1107 = vmatprep.subr.bf16.mxu0 0
    %1108 = vmatpush1.bf16.msra.mxu0 %v1045
    %1109 = vmatprep.subr.bf16.mxu0 0
    %1110 = vmatpush1.bf16.msra.mxu0 0
    %1111 = vmatprep.subr.bf16.mxu0 0
    %1112 = vmatpush1.bf16.msra.mxu0 0
    %1113 = vmatprep.subr.bf16.mxu0 0
    %1114 = vmatpush1.bf16.msra.mxu0 0
    %1115 = vmatprep.subr.bf16.mxu0 0
    %1116 = vmatpush1.bf16.msra.mxu0 0
    %1117 = vmatprep.subr.bf16.mxu0 0
    %1118 = vmatpush1.bf16.msra.mxu0 0
    %1119 = vmatprep.subr.bf16.mxu0 0
    %1120 = vmatpush1.bf16.msra.mxu0 0
    %1121 = vmatprep.subr.bf16.mxu0 0
    %1122 = vmatpush1.bf16.msra.mxu0 0
    %1123 = vmatprep.subr.bf16.mxu0 0
    %1124 = vmatpush1.bf16.msra.mxu0 0
    %1125 = vmatprep.subr.bf16.mxu0 0
    %1126 = vmatpush1.bf16.msra.mxu0 0
    %1127 = vmatprep.subr.bf16.mxu0 0
    %1128 = vmatpush1.bf16.msra.mxu0 0
    %1129 = vmatprep.subr.bf16.mxu0 0
    %1130 = vmatpush1.bf16.msra.mxu0 0
    %1131 = vmatprep.subr.bf16.mxu0 0
    %1132 = vmatpush1.bf16.msra.mxu0 0
    %1133 = vmatprep.mubr.bf16.mxu0 0
    %1134 = vmatmul.mubr.bf16.gmra.mrb[0].mxu0 %v128
    %v1135 = vpop.f32.mrb[0].mxu0
    %v1136 = vadd.f32 %v990, %v1135
    %v1137 = vpop.f32.mrb[0].mxu0
    %v1138 = vpop.f32.mrb[0].mxu0
    %v1139 = vadd.f32 %v990, %v1138
    %v1140 = vpop.f32.mrb[0].mxu0
    %1141 = vdwg.mxu0
    %v1142 = vmax.f32 %v1093, 0.0
    %v1143 = vmax.f32 %v1095, 0.0
    %v1144 = vmax.f32 %v1136, 0.0
    %v1145 = vmax.f32 %v1097, 0.0
    %v1146 = vmax.f32 %v1099, 0.0
    %v1147 = vmax.f32 %v1139, 0.0
    %v1148 = vpack.c.bf16 %v1145, %v1142
    %v1149 = vpack.c.bf16 %v1146, %v1143
    %v1150 = vpack.c.bf16 %v1147, %v1144
    %v1151 = vld [vmem:[%s3 + $0x180] sm:$0xf]
    %v1152 = vld [vmem:[%s3 + $0x184] sm:$0xf]
    %v1153 = vld [vmem:[%s3 + $0x188] sm:$0xf]
    %v1154 = vld [vmem:[%s3 + $0x18c] sm:$0xf]
    %v1155 = vld [vmem:[%s3 + $0x190] sm:$0xf]
    %v1156 = vld [vmem:[%s3 + $0x194] sm:$0xf]
    %v1157 = vld [vmem:[%s3 + $0x198] sm:$0xf]
    %v1158 = vld [vmem:[%s3 + $0x19c] sm:$0xf]
    %v1159 = vld [vmem:[%s3 + $0x1a0] sm:$0xf]
    %v1160 = vld [vmem:[%s3 + $0x1a4] sm:$0xf]
    %v1161 = vld [vmem:[%s3 + $0x1a8] sm:$0xf]
    %v1162 = vld [vmem:[%s3 + $0x1ac] sm:$0xf]
    %v1163 = vld [vmem:[%s3 + $0x1b0] sm:$0xf]
    %v1164 = vld [vmem:[%s3 + $0x1b4] sm:$0xf]
    %v1165 = vld [vmem:[%s3 + $0x1b8] sm:$0xf]
    %v1166 = vld [vmem:[%s3 + $0x1bc] sm:$0xf]
    %v1167 = vld [vmem:[%s3 + $0x1c0] sm:$0xf]
    %v1168 = vld [vmem:[%s3 + $0x1c4] sm:$0xf]
    %v1169 = vld [vmem:[%s3 + $0x1c8] sm:$0xf]
    %v1170 = vld [vmem:[%s3 + $0x1cc] sm:$0xf]
    %v1171 = vld [vmem:[%s3 + $0x1d0] sm:$0xf]
    %v1172 = vld [vmem:[%s3 + $0x1d4] sm:$0xf]
    %v1173 = vld [vmem:[%s3 + $0x1d8] sm:$0xf]
    %v1174 = vld [vmem:[%s3 + $0x1dc] sm:$0xf]
    %v1175 = vld [vmem:[%s3 + $0x1e0] sm:$0xf]
    %v1176 = vld [vmem:[%s3 + $0x1e4] sm:$0xf]
    %v1177 = vld [vmem:[%s3 + $0x1e8] sm:$0xf]
    %v1178 = vld [vmem:[%s3 + $0x1ec] sm:$0xf]
    %v1179 = vld [vmem:[%s3 + $0x1f0] sm:$0xf]
    %v1180 = vld [vmem:[%s3 + $0x1f4] sm:$0xf]
    %v1181 = vld [vmem:[%s3 + $0x1f8] sm:$0xf]
    %v1182 = vld [vmem:[%s3 + $0x1fc] sm:$0xf]
    %v1183 = vld [vmem:[%s3 + $0x200] sm:$0xf]
    %v1184 = vld [vmem:[%s3 + $0x204] sm:$0xf]
    %v1185 = vld [vmem:[%s3 + $0x208] sm:$0xf]
    %v1186 = vld [vmem:[%s3 + $0x20c] sm:$0xf]
    %v1187 = vld [vmem:[%s3 + $0x210] sm:$0xf]
    %v1188 = vld [vmem:[%s3 + $0x214] sm:$0xf]
    %v1189 = vld [vmem:[%s3 + $0x218] sm:$0xf]
    %v1190 = vld [vmem:[%s3 + $0x21c] sm:$0xf]
    %v1191 = vld [vmem:[%s3 + $0x220] sm:$0xf]
    %v1192 = vld [vmem:[%s3 + $0x224] sm:$0xf]
    %v1193 = vld [vmem:[%s3 + $0x228] sm:$0xf]
    %v1194 = vld [vmem:[%s3 + $0x22c] sm:$0xf]
    %v1195 = vld [vmem:[%s3 + $0x230] sm:$0xf]
    %v1196 = vld [vmem:[%s3 + $0x234] sm:$0xf]
    %v1197 = vld [vmem:[%s3 + $0x238] sm:$0xf]
    %v1198 = vld [vmem:[%s3 + $0x23c] sm:$0xf]
    %v1247 = vunpack.c.l.b16 %v1151
    %v1248 = vunpack.c.l.b16 %v1152
    %v1249 = vunpack.c.l.b16 %v1153
    %v1250 = vunpack.c.l.b16 %v1154
    %v1251 = vunpack.c.l.b16 %v1155
    %v1252 = vunpack.c.l.b16 %v1156
    %v1253 = vunpack.c.l.b16 %v1157
    %v1254 = vunpack.c.l.b16 %v1158
    %v1255 = vunpack.c.l.b16 %v1159
    %v1256 = vunpack.c.l.b16 %v1160
    %v1257 = vunpack.c.l.b16 %v1161
    %v1258 = vunpack.c.l.b16 %v1162
    %v1259 = vunpack.c.l.b16 %v1163
    %v1260 = vunpack.c.l.b16 %v1164
    %v1261 = vunpack.c.l.b16 %v1165
    %v1262 = vunpack.c.l.b16 %v1166
    %v1263 = vunpack.c.l.b16 %v1167
    %v1264 = vunpack.c.l.b16 %v1168
    %v1265 = vunpack.c.l.b16 %v1169
    %v1266 = vunpack.c.l.b16 %v1170
    %v1267 = vunpack.c.l.b16 %v1171
    %v1268 = vunpack.c.l.b16 %v1172
    %v1269 = vunpack.c.l.b16 %v1173
    %v1270 = vunpack.c.l.b16 %v1174
    %v1271 = vunpack.c.l.b16 %v1175
    %v1272 = vunpack.c.l.b16 %v1176
    %v1273 = vunpack.c.l.b16 %v1177
    %v1274 = vunpack.c.l.b16 %v1178
    %v1275 = vunpack.c.l.b16 %v1179
    %v1276 = vunpack.c.l.b16 %v1180
    %v1277 = vunpack.c.l.b16 %v1181
    %v1278 = vunpack.c.l.b16 %v1182
    %v1279 = vunpack.c.l.b16 %v1183
    %v1280 = vunpack.c.l.b16 %v1184
    %v1281 = vunpack.c.l.b16 %v1185
    %v1282 = vunpack.c.l.b16 %v1186
    %v1283 = vunpack.c.l.b16 %v1187
    %v1284 = vunpack.c.l.b16 %v1188
    %v1285 = vunpack.c.l.b16 %v1189
    %v1286 = vunpack.c.l.b16 %v1190
    %v1287 = vunpack.c.l.b16 %v1191
    %v1288 = vunpack.c.l.b16 %v1192
    %v1289 = vunpack.c.l.b16 %v1193
    %v1290 = vunpack.c.l.b16 %v1194
    %v1291 = vunpack.c.l.b16 %v1195
    %v1292 = vunpack.c.l.b16 %v1196
    %v1293 = vunpack.c.l.b16 %v1197
    %v1294 = vunpack.c.l.b16 %v1198
    %v1295 = vpack.c.b16 %v1248, %v1247
    %v1296 = vpack.c.b16 %v1250, %v1249
    %v1297 = vpack.c.b16 %v1252, %v1251
    %v1298 = vpack.c.b16 %v1254, %v1253
    %v1299 = vpack.c.b16 %v1256, %v1255
    %v1300 = vpack.c.b16 %v1258, %v1257
    %v1301 = vpack.c.b16 %v1260, %v1259
    %v1302 = vpack.c.b16 %v1262, %v1261
    %v1303 = vpack.c.b16 %v1264, %v1263
    %v1304 = vpack.c.b16 %v1266, %v1265
    %v1305 = vpack.c.b16 %v1268, %v1267
    %v1306 = vpack.c.b16 %v1270, %v1269
    %v1307 = vpack.c.b16 %v1272, %v1271
    %v1308 = vpack.c.b16 %v1274, %v1273
    %v1309 = vpack.c.b16 %v1276, %v1275
    %v1310 = vpack.c.b16 %v1278, %v1277
    %v1311 = vpack.c.b16 %v1280, %v1279
    %v1312 = vpack.c.b16 %v1282, %v1281
    %v1313 = vpack.c.b16 %v1284, %v1283
    %v1314 = vpack.c.b16 %v1286, %v1285
    %v1315 = vpack.c.b16 %v1288, %v1287
    %v1316 = vpack.c.b16 %v1290, %v1289
    %v1317 = vpack.c.b16 %v1292, %v1291
    %v1318 = vpack.c.b16 %v1294, %v1293
    %1343 = vmatprep.subr.bf16.mxu0 0
    %1344 = vmatpush1.bf16.msra.mxu0 %v1295
    %1345 = vmatprep.subr.bf16.mxu0 0
    %1346 = vmatpush1.bf16.msra.mxu0 %v1296
    %1347 = vmatprep.subr.bf16.mxu0 0
    %1348 = vmatpush1.bf16.msra.mxu0 %v1297
    %1349 = vmatprep.subr.bf16.mxu0 0
    %1350 = vmatpush1.bf16.msra.mxu0 %v1298
    %1351 = vmatprep.subr.bf16.mxu0 0
    %1352 = vmatpush1.bf16.msra.mxu0 %v1299
    %1353 = vmatprep.subr.bf16.mxu0 0
    %1354 = vmatpush1.bf16.msra.mxu0 %v1300
    %1355 = vmatprep.subr.bf16.mxu0 0
    %1356 = vmatpush1.bf16.msra.mxu0 %v1301
    %1357 = vmatprep.subr.bf16.mxu0 0
    %1358 = vmatpush1.bf16.msra.mxu0 %v1302
    %1359 = vmatprep.subr.bf16.mxu0 0
    %1360 = vmatpush1.bf16.msra.mxu0 %v1303
    %1361 = vmatprep.subr.bf16.mxu0 0
    %1362 = vmatpush1.bf16.msra.mxu0 %v1304
    %1363 = vmatprep.subr.bf16.mxu0 0
    %1364 = vmatpush1.bf16.msra.mxu0 %v1305
    %1365 = vmatprep.subr.bf16.mxu0 0
    %1366 = vmatpush1.bf16.msra.mxu0 %v1306
    %1367 = vmatprep.subr.bf16.mxu0 0
    %1368 = vmatpush1.bf16.msra.mxu0 %v1307
    %1369 = vmatprep.subr.bf16.mxu0 0
    %1370 = vmatpush1.bf16.msra.mxu0 %v1308
    %1371 = vmatprep.subr.bf16.mxu0 0
    %1372 = vmatpush1.bf16.msra.mxu0 %v1309
    %1373 = vmatprep.subr.bf16.mxu0 0
    %1374 = vmatpush1.bf16.msra.mxu0 %v1310
    %1375 = vmatprep.mubr.bf16.mxu0 %v1149
    %1376 = vmatmul.mubr.bf16.gmra.mrb[0].mxu0 %v1148
    %v1377 = vpop.f32.mrb[0].mxu0
    %v1378 = vadd.f32 0.0, %v1377
    %v1379 = vpop.f32.mrb[0].mxu0
    %v1380 = vpop.f32.mrb[0].mxu0
    %v1381 = vadd.f32 0.0, %v1380
    %v1382 = vpop.f32.mrb[0].mxu0
    %1383 = vdwg.mxu0
    %1384 = vmatprep.subr.bf16.mxu0 0
    %1385 = vmatpush1.bf16.msra.mxu0 %v1311
    %1386 = vmatprep.subr.bf16.mxu0 0
    %1387 = vmatpush1.bf16.msra.mxu0 %v1312
    %1388 = vmatprep.subr.bf16.mxu0 0
    %1389 = vmatpush1.bf16.msra.mxu0 %v1313
    %1390 = vmatprep.subr.bf16.mxu0 0
    %1391 = vmatpush1.bf16.msra.mxu0 %v1314
    %1392 = vmatprep.subr.bf16.mxu0 0
    %1393 = vmatpush1.bf16.msra.mxu0 %v1315
    %1394 = vmatprep.subr.bf16.mxu0 0
    %1395 = vmatpush1.bf16.msra.mxu0 %v1316
    %1396 = vmatprep.subr.bf16.mxu0 0
    %1397 = vmatpush1.bf16.msra.mxu0 %v1317
    %1398 = vmatprep.subr.bf16.mxu0 0
    %1399 = vmatpush1.bf16.msra.mxu0 %v1318
    %1400 = vmatprep.subr.bf16.mxu0 0
    %1401 = vmatpush1.bf16.msra.mxu0 0
    %1402 = vmatprep.subr.bf16.mxu0 0
    %1403 = vmatpush1.bf16.msra.mxu0 0
    %1404 = vmatprep.subr.bf16.mxu0 0
    %1405 = vmatpush1.bf16.msra.mxu0 0
    %1406 = vmatprep.subr.bf16.mxu0 0
    %1407 = vmatpush1.bf16.msra.mxu0 0
    %1408 = vmatprep.subr.bf16.mxu0 0
    %1409 = vmatpush1.bf16.msra.mxu0 0
    %1410 = vmatprep.subr.bf16.mxu0 0
    %1411 = vmatpush1.bf16.msra.mxu0 0
    %1412 = vmatprep.subr.bf16.mxu0 0
    %1413 = vmatpush1.bf16.msra.mxu0 0
    %1414 = vmatprep.subr.bf16.mxu0 0
    %1415 = vmatpush1.bf16.msra.mxu0 0
    %1416 = vmatprep.mubr.bf16.mxu0 0
    %1417 = vmatmul.mubr.bf16.gmra.mrb[0].mxu0 %v1150
    %v1418 = vpop.f32.mrb[0].mxu0
    %v1419 = vadd.f32 %v1378, %v1418
    %v1420 = vpop.f32.mrb[0].mxu0
    %v1421 = vpop.f32.mrb[0].mxu0
    %v1422 = vadd.f32 %v1381, %v1421
    %v1423 = vpop.f32.mrb[0].mxu0
    %1424 = vdwg.mxu0
    %v1425 = vadd.f32 %v955, %v1419
    %v1426 = vadd.f32 %v958, %v1422
    %v1427 = vld [vmem:[%s4] sm:$0x1]
    %v1429 = vlaneseq
    %v1430 = vshrl.u32 %v1429, 7
    %v1431 = vsub.s32 0, %v1430
    %v1432 = vrot.slane %v1427, %v1431
    %v1434 = vadd.f32 %v1425, %v1432
    %v1435 = vadd.f32 %v1426, %v1432
    %1436 = vst [vmem:[#allocation2] sm:$0xff] %v1434
    %1437 = vst [vmem:[#allocation2 + $0x8] sm:$0xff] %v1435
    // Predicated region
    $region22: #{graph_mlp_forward.1} parent=1 // pred_check
      _
    $region23: #{graph_mlp_forward.1} parent=1 // pred_check_branch
      %1439 = sbr.rel (0) target = $region25
    $region24: #{graph_mlp_forward.1} parent=1 // pred_region
      %s1441 = ssub.s32 256, 256
      %1442 = vsyncadd [#allocation3], %s1441
      %s1443 = sshll.u32 [#allocation2], 4
      %s1444 = int_to_ptr.vmem [resolvable:$true] %s1443
      %1449 = dma.vmem_to_hbm [thread:$0]  %s1444, 256, %s5, [#allocation3], 128, 128, 8
    $region25: #{graph_mlp_forward.1} parent=1 // pred_fallthru
      _
    // Predicated region
    $region26: #{graph_mlp_forward.1} parent=1 // pred_check
      _
    $region27: #{graph_mlp_forward.1} parent=1 // pred_check_branch
      %1451 = sbr.rel (0) target = $region29
    $region28: #{graph_mlp_forward.1} parent=1 // pred_region
      %1452 = dma.done [#allocation3], 256
    $region29: #{graph_mlp_forward.1} parent=1 // pred_fallthru
      _
    %1453 = vsyncpa [#allocation3], 1

</llo_original>
